<compile_context>
chip_gen: v6e
topology: v6e:2x2x1
jax: 0.10.0
libtpu: 0.0.40
codegen_flags: <defaults>
</compile_context>

<pallas_src>
import numpy as np
import jax
import jax.numpy as jnp
from jax import lax
from jax.experimental import pallas as pl
from jax.experimental.pallas import tpu as pltpu


# ----------------------------------------------------------------------------
# Pallas kernel
# ----------------------------------------------------------------------------
def reverse_transition_kernel(x_ref, w_ref, b_ref, o_ref):
    # x_ref: (1, r, td)   w_ref: (ts, r)   b_ref: (ts, 1)   o_ref: (1, ts, td)
    y = lax.dot_general(w_ref[...], x_ref[0], (((1,), (0,)), ((), ())),
                        preferred_element_type=jnp.float32)   # (ts, td) f32 accumulate on MXU
    o_ref[0] = (y + b_ref[...]).astype(o_ref.dtype)


# ----------------------------------------------------------------------------
# tile-size helpers
# ----------------------------------------------------------------------------
def _pick_tile(total, quantum, cap):
    """Largest multiple of `quantum` that divides `total` and is <= max(cap, quantum).
    Falls back to the full extent when `total` is not a multiple of `quantum`
    (single tile, possibly lane/sublane-masked)."""
    if total <= quantum or total % quantum != 0:
        return total
    cap = max(int(cap), quantum)
    best = quantum
    t = quantum
    while t <= min(total, cap):
        if total % t == 0:
            best = t
        t += quantum
    return best


def _vmem_capacity_bytes():
    try:
        return int(pltpu.get_tpu_info().vmem_capacity_bytes)
    except Exception:
        return 64 * 1024 * 1024     # conservative fallback (v7x per-core VMEM)


# ----------------------------------------------------------------------------
# pallas_call wrapper
# ----------------------------------------------------------------------------
def reverse_transition(x, w, b, *, max_tile_d=2048, max_tile_s=1024):
    """out[b, s, d] = sum_r w[s, r] * x[b, r, d] + b[s]
       (== x.transpose(1,2) -> Linear(r, seq_len) -> transpose(1,2))."""
    bs, r, d_model = x.shape
    seq_len = w.shape[0]
    assert w.shape == (seq_len, r) and b.shape == (seq_len,)

    out_dtype = x.dtype
    x_item = jnp.dtype(x.dtype).itemsize
    w_item = jnp.dtype(w.dtype).itemsize
    out_item = jnp.dtype(out_dtype).itemsize

    vmem_cap = _vmem_capacity_bytes()
    budget = int(vmem_cap * 0.4)   # headroom for Mosaic internal scratch / compiler temps

    # seq_len tile: sublane-aligned (multiple of 8); bounds the output block & weight tile.
    ts = _pick_tile(seq_len, 8, max_tile_s)

    # d_model tile: lane-dense (multiple of 128), sized so the double-buffered x + out
    # blocks stay inside the per-generation VMEM budget.
    per_td_bytes = 2 * (r * x_item + ts * out_item)        # double-buffered bytes per td column
    td_cap = min(max_tile_d, max(128, budget // max(per_td_bytes, 1)))
    td = _pick_tile(d_model, 128, td_cap)
    # NOTE: if d_model is not a multiple of 128 we fall back to one full-width (masked) tile
    # rather than risk a non-dividing block shape.

    grid = (bs, seq_len // ts, d_model // td)

    b2d = b.reshape(seq_len, 1)
    b_item = jnp.dtype(b2d.dtype).itemsize

    # Explicit scoped-VMEM limit so the tiles we just sized are not clipped by the
    # 16 MiB / 32 MiB defaults (double-buffered x + out + w + bias blocks, plus headroom).
    footprint = 2 * (r * td * x_item + ts * td * out_item + ts * r * w_item + ts * b_item)
    vmem_limit = int(min(vmem_cap, max(footprint + (8 << 20), 16 << 20)))

    flops = 2 * bs * seq_len * r * d_model
    bytes_accessed = (x.size * x_item + w.size * w_item + b2d.size * b_item
                      + bs * seq_len * d_model * out_item)

    return pl.pallas_call(
        reverse_transition_kernel,
        out_shape=jax.ShapeDtypeStruct((bs, seq_len, d_model), out_dtype),
        grid=grid,
        in_specs=[
            # Activations: streamed, one (r, td) slab per step.  If an xprof trace ever shows
            # this DMA exposed, add pipeline_mode=pl.Buffered(3) here (the block is tiny).
            pl.BlockSpec((1, r, td), lambda i, s, j: (i, 0, j)),
            pl.BlockSpec((ts, r), lambda i, s, j: (s, 0)),     # weight tile (tiny)
            pl.BlockSpec((ts, 1), lambda i, s, j: (s, 0)),     # bias tile
        ],
        out_specs=pl.BlockSpec((1, ts, td), lambda i, s, j: (i, s, j)),
        compiler_params=pltpu.CompilerParams(
            dimension_semantics=("parallel", "parallel", "parallel"),
            vmem_limit_bytes=vmem_limit),
        cost_estimate=pl.CostEstimate(flops=flops, transcendentals=0,
                                      bytes_accessed=bytes_accessed),
    )(x, w, b2d)


# ----------------------------------------------------------------------------
# pure-JAX reference (mirrors the PyTorch module exactly)
# ----------------------------------------------------------------------------
def ref_forward(x, w, b):
    xt = jnp.swapaxes(x, 1, 2)         # (bs, d_model, r)
    y = xt @ w.T + b                   # (bs, d_model, seq_len)
    return jnp.swapaxes(y, 1, 2)       # (bs, seq_len, d_model)


# ----------------------------------------------------------------------------
if __name__ == "__main__":
    bs, r, seq_len, d_model = 2, 4, 16, 256

    key = jax.random.PRNGKey(0)
    kx, kw, kb = jax.random.split(key, 3)

    x = jax.random.normal(kx, (bs, r, d_model), jnp.float32)
    bound = 1.0 / np.sqrt(r)           # nn.Linear default init range
    w = jax.random.uniform(kw, (seq_len, r), jnp.float32, -bound, bound)
    b = jax.random.uniform(kb, (seq_len,), jnp.float32, -bound, bound)

    # f32 path: bit-accurate vs. the reference.
    out = jax.block_until_ready(reverse_transition(x, w, b))
    ref = ref_forward(x, w, b)
    assert out.shape == (bs, seq_len, d_model), out.shape
    np.testing.assert_allclose(np.asarray(out), np.asarray(ref), rtol=1e-5, atol=1e-5)

    # bf16 I/O path (memory-bound op -> ~2x fewer bytes; MXU still accumulates in f32).
    out_bf16 = jax.block_until_ready(
        reverse_transition(x.astype(jnp.bfloat16),
                           w.astype(jnp.bfloat16),
                           b.astype(jnp.bfloat16)))
    np.testing.assert_allclose(np.asarray(out_bf16, dtype=np.float32), np.asarray(ref),
                               rtol=1e-1, atol=1e-1)

    print("KERNEL_OK")
</pallas_src>

<mosaic_0001>
module attributes {stable_mosaic.version = 11 : i64} {
  func.func @reverse_transition_kernel(%arg0: i32, %arg1: i32, %arg2: i32, %arg3: memref<1x4x256xf32, #tpu.memory_space<vmem>>, %arg4: memref<16x4xf32, #tpu.memory_space<vmem>>, %arg5: memref<16x1xf32, #tpu.memory_space<vmem>>, %arg6: memref<1x16x256xf32, #tpu.memory_space<vmem>>) attributes {dimension_semantics = [#tpu.dimension_semantics<parallel>, #tpu.dimension_semantics<parallel>, #tpu.dimension_semantics<parallel>], iteration_bounds = array<i64: 2, 1, 1>, scalar_prefetch = 0 : i64, scratch_operands = 0 : i64, tpu.core_type = #tpu.core_type<tc>, window_params = [{transform_indices = @transform_0, window_bounds = array<i64: 1, 4, 256>}, {transform_indices = @transform_1, window_bounds = array<i64: 16, 4>}, {transform_indices = @transform_2, window_bounds = array<i64: 16, 1>}, {transform_indices = @transform_3, window_bounds = array<i64: 1, 16, 256>}]} {
    %c0 = arith.constant 0 : index
    %c0_0 = arith.constant 0 : index
    %0 = vector.load %arg4[%c0, %c0_0] : memref<16x4xf32, #tpu.memory_space<vmem>>, vector<16x4xf32>
    %c0_1 = arith.constant 0 : index
    %c0_2 = arith.constant 0 : index
    %c0_3 = arith.constant 0 : index
    %1 = vector.load %arg3[%c0_1, %c0_2, %c0_3] : memref<1x4x256xf32, #tpu.memory_space<vmem>>, vector<1x4x256xf32>
    %2 = vector.shape_cast %1 : vector<1x4x256xf32> to vector<4x256xf32>
    %cst = arith.constant dense<0.000000e+00> : vector<16x256xf32>
    %3 = tpu.matmul %0, %2, %cst {dimension_numbers = #tpu.dot_dimension_numbers<[1], [0], [0], [1], [0, 0, 1, 1], [], []>} : vector<16x4xf32>, vector<4x256xf32>, vector<16x256xf32> -> vector<16x256xf32>
    %c0_4 = arith.constant 0 : index
    %c0_5 = arith.constant 0 : index
    %4 = vector.load %arg5[%c0_4, %c0_5] : memref<16x1xf32, #tpu.memory_space<vmem>>, vector<16x1xf32>
    %5 = vector.broadcast %4 : vector<16x1xf32> to vector<16x256xf32>
    %6 = arith.addf %3, %5 : vector<16x256xf32>
    %c0_6 = arith.constant 0 : index
    %c0_7 = arith.constant 0 : index
    %c0_8 = arith.constant 0 : index
    %7 = vector.load %arg6[%c0_6, %c0_7, %c0_8] : memref<1x16x256xf32, #tpu.memory_space<vmem>>, vector<1x16x256xf32>
    %8 = vector.shape_cast %7 : vector<1x16x256xf32> to vector<16x256xf32>
    %9 = vector.shape_cast %6 : vector<16x256xf32> to vector<1x16x256xf32>
    tpu.vector_store %arg6[%c0_6, %c0_7, %c0_8], %9 {strides = array<i32>} : memref<1x16x256xf32, #tpu.memory_space<vmem>>, vector<1x16x256xf32>,
    return
  }
  func.func @transform_0(%arg0: i32, %arg1: i32, %arg2: i32) -> (i32, i32, i32) {
    %c0_i32 = arith.constant 0 : i32
    %c0_i32_0 = arith.constant 0 : i32
    return %arg0, %c0_i32, %arg2 : i32, i32, i32
  }
  func.func @transform_1(%arg0: i32, %arg1: i32, %arg2: i32) -> (i32, i32) {
    %c0_i32 = arith.constant 0 : i32
    %c0_i32_0 = arith.constant 0 : i32
    return %arg1, %c0_i32 : i32, i32
  }
  func.func @transform_2(%arg0: i32, %arg1: i32, %arg2: i32) -> (i32, i32) {
    %c0_i32 = arith.constant 0 : i32
    %c0_i32_0 = arith.constant 0 : i32
    return %arg1, %c0_i32 : i32, i32
  }
  func.func @transform_3(%arg0: i32, %arg1: i32, %arg2: i32) -> (i32, i32, i32) {
    %c0_i32 = arith.constant 0 : i32
    return %arg0, %arg1, %arg2 : i32, i32, i32
  }
}

</mosaic_0001>

<llo_original>
// kernel: tpu_custom_call.1
$region0: #{tpu_custom_call.1}
  #allocation0 [shape = 'u32[]', space=smem, size = 0x4, offset = 0x4, fixed_abs, tag = 'smem constant byte address 0x4 - core index']
  #allocation1 [shape = 'u32[144,128]{1,0:T(1,128)}', space=vmem, size = 0x12000, scoped, tag = 'internal scratch']
  %s0 = inlined_call_operand.vmem [shape: f32[2,4,256], index: 0, kind: input, shape index: {}]
  %s1 = inlined_call_operand.vmem [shape: f32[16,4], index: 1, kind: input, shape index: {}]
  %s2 = inlined_call_operand.vmem [shape: f32[16,1], index: 2, kind: input, shape index: {}]
  %s3 = inlined_call_operand.hbm [shape: f32[2,16,256], index: 3, kind: output, shape index: {}]
  %s4 = sld [smem:[#allocation0]]
  $region45: #{tpu_custom_call.1} parent=0
    _
  %s6 = ssub.s32 1, %s4
  %s7 = scalar_select 0, %s6, %s4
  $region1: #{tpu_custom_call.1} parent=0
    #allocation2 [shape = 'u8[32768]{0}', space=vmem, size = 0x8000, scoped, tag = 'output window, operand 0']
    #allocation3 [shape = 's32[2]{0}', space=sflag, size = 0x8, scoped, tag = 'scoped memory for tpu_custom_call.1']
    %8 = vsyncpa [#allocation3], 0
    %s9 = scalar_lea.sflag [#allocation3], 1
    %10 = vsyncpa %s9, 0
    loop: start=0, step=1, limit=4
    $region2: #{tpu_custom_call.1} parent=1 // loop_pre_header
      _
    $region3: #{tpu_custom_call.1} parent=1 // loop_header
      %s12 = sphi 0, %s16
      %p13 = scmp.ge.s32.totalorder %s12, 4
      %s19 = sphi 0, %s38
      %s20 = sphi 0, %s34
      %s21 = sphi 0, %s30
      %s22 = sphi 0, %s19
      %s23 = sphi 0, %s20
      %s24 = sphi 0, %s21
      %s25 = sphi 0, %s22
      %s26 = sphi 0, %s23
      %s27 = sphi 0, %s24
      %s43 = sphi 0, %s45
      %s46 = sphi 0, %s43
      %s47 = sphi 0, %s46
      %s63 = sphi 0, %s47
      %s69 = sphi 0, %s71
      %s72 = sphi 0, %s69
      %s73 = sphi 0, %s72
      %s89 = sphi 0, %s73
      %s95 = sphi 0, %s97
      %s98 = sphi 0, %s95
      %s99 = sphi 0, %s98
      %s115 = sphi 0, %s99
      %s125 = sphi 0, %s127
      %s128 = sphi 0, %s125
      %s129 = sphi 0, %s128
      %s145 = sphi 0, %s129
    $region4: #{tpu_custom_call.1} parent=1 // loop_header_branch
      %15 = sbr.rel (%p13) target = $region8
    $region5: #{tpu_custom_call.1} parent=1 // loop_body
      %s17 = ssub.s32 %s12, 1
      %s18 = ssub.s32 %s12, 2
      %s28 = sadd.s32 1, %s21
      %p29 = scmp.ge.s32.totalorder %s28, 1
      %s30 = scalar_select %p29, 0, %s28
      %s31 = sadd.s32 1, %s20
      %s32 = scalar_select %p29, %s31, %s20
      %p33 = scmp.ge.s32.totalorder %s32, 1
      %s34 = scalar_select %p33, 0, %s32
      %s35 = sadd.s32 1, %s19
      %s36 = scalar_select %p33, %s35, %s19
      %p37 = scmp.ge.s32.totalorder %s36, 2
      %s38 = scalar_select %p37, 0, %s36
      %s39 = ssub.s32 %s19, %s38
      %s40 = ssub.s32 %s21, %s30
      %s41 = sor.u32 %s39, %s40
      %p42 = scmp.eq.s32.totalorder %s41, 0
      %s44 = sadd.s32 %s43, 1
      %s45 = scalar_select %p42, %s43, %s44
      %p48 = pneg %p42
      %p49 = scmp.eq.s32.totalorder %s12, 1
      %p50 = por %p48, %p49
      %p51 = scmp.ne.s32.totalorder %s43, %s46
      %p52 = scmp.eq.s32.totalorder %s12, 0
      %p53 = por %p51, %p52
      %p54 = scmp.ne.s32.totalorder %s43, %s46
      %p55 = scmp.eq.s32.totalorder %s17, 1
      %p56 = por %p54, %p55
      %p57 = scmp.ne.s32.totalorder %s46, %s47
      %p58 = scmp.eq.s32.totalorder %s17, 0
      %p59 = por %p57, %p58
      %p60 = scmp.ne.s32.totalorder %s46, %s47
      %p61 = scmp.eq.s32.totalorder %s18, 1
      %p62 = por %p60, %p61
      %p64 = scmp.ne.s32.totalorder %s47, %s63
      %p65 = scmp.eq.s32.totalorder %s18, 0
      %p66 = por %p64, %p65
      %s67 = ssub.s32 %s20, %s34
      %p68 = scmp.eq.s32.totalorder %s67, 0
      %s70 = sadd.s32 %s69, 1
      %s71 = scalar_select %p68, %s69, %s70
      %p74 = pneg %p68
      %p75 = scmp.eq.s32.totalorder %s12, 1
      %p76 = por %p74, %p75
      %p77 = scmp.ne.s32.totalorder %s69, %s72
      %p78 = scmp.eq.s32.totalorder %s12, 0
      %p79 = por %p77, %p78
      %p80 = scmp.ne.s32.totalorder %s69, %s72
      %p81 = scmp.eq.s32.totalorder %s17, 1
      %p82 = por %p80, %p81
      %p83 = scmp.ne.s32.totalorder %s72, %s73
      %p84 = scmp.eq.s32.totalorder %s17, 0
      %p85 = por %p83, %p84
      %p86 = scmp.ne.s32.totalorder %s72, %s73
      %p87 = scmp.eq.s32.totalorder %s18, 1
      %p88 = por %p86, %p87
      %p90 = scmp.ne.s32.totalorder %s73, %s89
      %p91 = scmp.eq.s32.totalorder %s18, 0
      %p92 = por %p90, %p91
      %s93 = ssub.s32 %s20, %s34
      %p94 = scmp.eq.s32.totalorder %s93, 0
      %s96 = sadd.s32 %s95, 1
      %s97 = scalar_select %p94, %s95, %s96
      %p100 = pneg %p94
      %p101 = scmp.eq.s32.totalorder %s12, 1
      %p102 = por %p100, %p101
      %p103 = scmp.ne.s32.totalorder %s95, %s98
      %p104 = scmp.eq.s32.totalorder %s12, 0
      %p105 = por %p103, %p104
      %p106 = scmp.ne.s32.totalorder %s95, %s98
      %p107 = scmp.eq.s32.totalorder %s17, 1
      %p108 = por %p106, %p107
      %p109 = scmp.ne.s32.totalorder %s98, %s99
      %p110 = scmp.eq.s32.totalorder %s17, 0
      %p111 = por %p109, %p110
      %p112 = scmp.ne.s32.totalorder %s98, %s99
      %p113 = scmp.eq.s32.totalorder %s18, 1
      %p114 = por %p112, %p113
      %p116 = scmp.ne.s32.totalorder %s99, %s115
      %p117 = scmp.eq.s32.totalorder %s18, 0
      %p118 = por %p116, %p117
      %s119 = ssub.s32 %s19, %s38
      %s120 = ssub.s32 %s20, %s34
      %s121 = sor.u32 %s119, %s120
      %s122 = ssub.s32 %s21, %s30
      %s123 = sor.u32 %s121, %s122
      %p124 = scmp.eq.s32.totalorder %s123, 0
      %s126 = sadd.s32 %s125, 1
      %s127 = scalar_select %p124, %s125, %s126
      %p130 = pneg %p124
      %p131 = scmp.eq.s32.totalorder %s12, 1
      %p132 = por %p130, %p131
      %p133 = scmp.ne.s32.totalorder %s125, %s128
      %p134 = scmp.eq.s32.totalorder %s12, 0
      %p135 = por %p133, %p134
      %p136 = scmp.ne.s32.totalorder %s125, %s128
      %p137 = scmp.eq.s32.totalorder %s17, 1
      %p138 = por %p136, %p137
      %p139 = scmp.ne.s32.totalorder %s128, %s129
      %p140 = scmp.eq.s32.totalorder %s17, 0
      %p141 = por %p139, %p140
      %p142 = scmp.ne.s32.totalorder %s128, %s129
      %p143 = scmp.eq.s32.totalorder %s18, 1
      %p144 = por %p142, %p143
      %p146 = scmp.ne.s32.totalorder %s129, %s145
      %p147 = scmp.eq.s32.totalorder %s18, 0
      %p148 = por %p146, %p147
      %p149 = scmp.le.s32.totalorder 1, %s12
      %p150 = scmp.lt.s32.totalorder %s12, 3
      %p151 = pnand %p149, %p150
      %p152 = pneg %p151
      // Predicated region
      $region9: #{tpu_custom_call.1} parent=5 // pred_check
        _
      $region10: #{tpu_custom_call.1} parent=5 // pred_check_branch
        %154 = sbr.rel (%p151) target = $region12
      $region11: #{tpu_custom_call.1} parent=5 // pred_region
        %s155 = ssub.s32 %s12, 1
        // Predicated region
        $region13: #{tpu_custom_call.1} parent=11 // pred_check
          %p156 = pneg %p85
        $region14: #{tpu_custom_call.1} parent=11 // pred_check_branch
          %158 = sbr.rel (%p156) target = $region16
        $region15: #{tpu_custom_call.1} parent=11 // pred_region
          %s159 = smul.u32 2, %s23
          %p160 = scmp.lt.s32.totalorder %s159, 1
          %s161 = scalar_select %p160, %s159, 1
          %s162 = smul.addr %s161, 8
          %s163 = scalar_lea.vmem %s1, %s162
          %s164 = smul.u32 2, %s23
        $region16: #{tpu_custom_call.1} parent=11 // pred_fallthru
          _
        // Predicated region
        $region17: #{tpu_custom_call.1} parent=11 // pred_check
          %p165 = pneg %p111
        $region18: #{tpu_custom_call.1} parent=11 // pred_check_branch
          %167 = sbr.rel (%p165) target = $region20
        $region19: #{tpu_custom_call.1} parent=11 // pred_region
          %s168 = smul.u32 2, %s23
          %p169 = scmp.lt.s32.totalorder %s168, 1
          %s170 = scalar_select %p169, %s168, 1
          %s171 = smul.addr %s170, 8
          %s172 = scalar_lea.vmem %s2, %s171
          %s173 = smul.u32 2, %s23
        $region20: #{tpu_custom_call.1} parent=11 // pred_fallthru
          _
      $region12: #{tpu_custom_call.1} parent=5 // pred_fallthru
        _
      %p174 = scmp.lt.s32.totalorder %s12, 2
      // Predicated region
      $region21: #{tpu_custom_call.1} parent=5 // pred_check
        %p175 = pneg %p174
      $region22: #{tpu_custom_call.1} parent=5 // pred_check_branch
        %177 = sbr.rel (%p175) target = $region24
      $region23: #{tpu_custom_call.1} parent=5 // pred_region
        // Predicated region
        $region25: #{tpu_custom_call.1} parent=23 // pred_check
          %p178 = pneg %p53
        $region26: #{tpu_custom_call.1} parent=23 // pred_check_branch
          %180 = sbr.rel (%p178) target = $region28
        $region27: #{tpu_custom_call.1} parent=23 // pred_region
          %s181 = smul.u32 2, %s21
          %p182 = scmp.lt.s32.totalorder %s19, 1
          %s183 = scalar_select %p182, %s19, 1
          %p184 = scmp.lt.s32.totalorder %s181, 1
          %s185 = scalar_select %p184, %s181, 1
          %s186 = smul.addr %s183, 2
          %s187 = sadd.s32 %s185, %s186
          %s188 = smul.addr %s187, 4
          %s189 = scalar_lea.vmem %s0, %s188
          %s190 = smul.u32 2, %s21
        $region28: #{tpu_custom_call.1} parent=23 // pred_fallthru
          _
      $region24: #{tpu_custom_call.1} parent=5 // pred_fallthru
        _
      %p191 = scmp.le.s32.totalorder 1, %s12
      %p192 = scmp.lt.s32.totalorder %s12, 3
      %p193 = pnand %p191, %p192
      %p194 = pneg %p193
      // Predicated region
      $region29: #{tpu_custom_call.1} parent=5 // pred_check
        _
      $region30: #{tpu_custom_call.1} parent=5 // pred_check_branch
        %196 = sbr.rel (%p193) target = $region32
      $region31: #{tpu_custom_call.1} parent=5 // pred_region
        %s197 = ssub.s32 %s12, 1
        %s198 = smul.u32 2, %s24
        %p199 = scmp.lt.s32.totalorder %s22, 1
        %s200 = scalar_select %p199, %s22, 1
        %p201 = scmp.lt.s32.totalorder %s198, 1
        %s202 = scalar_select %p201, %s198, 1
        %s203 = smul.addr %s200, 2
        %s204 = sadd.s32 %s202, %s203
        %s205 = smul.addr %s204, 4
        %s206 = scalar_lea.vmem %s0, %s205
        %p207 = pneg %p59
        %p208 = pneg %p56
        %s209 = smul.u32 2, %s23
        %p210 = scmp.lt.s32.totalorder %s209, 1
        %s211 = scalar_select %p210, %s209, 1
        %s212 = smul.addr %s211, 8
        %s213 = scalar_lea.vmem %s1, %s212
        %p214 = pneg %p85
        %p215 = pneg %p82
        %s216 = smul.u32 2, %s23
        %p217 = scmp.lt.s32.totalorder %s216, 1
        %s218 = scalar_select %p217, %s216, 1
        %s219 = smul.addr %s218, 8
        %s220 = scalar_lea.vmem %s2, %s219
        %p221 = pneg %p111
        %p222 = pneg %p108
        %p223 = pneg %p141
        %p224 = pneg %p138
        %s225 = sand.u32 %s128, 1
        %s226 = scalar_lea.sflag [#allocation3], %s225
        %s227 = sand.u32 %s128, 1
        %s228 = smul.addr %s227, 32
        %s229 = scalar_lea.vmem [#allocation2], %s228
        %s230 = smul.u32 2, %s24
        %p231 = scmp.lt.s32.totalorder %s22, 1
        %s232 = scalar_select %p231, %s22, 1
        %p233 = scmp.lt.s32.totalorder %s230, 1
        %s234 = scalar_select %p233, %s230, 1
        %s235 = smul.addr %s232, 2
        %s236 = sadd.s32 %s234, %s235
        %s237 = smul.addr %s236, 4
        %s238 = scalar_lea.vmem %s0, %s237
        %s239 = smul.u32 2, %s24
        %s240 = smul.u32 2, %s23
        %p241 = scmp.lt.s32.totalorder %s240, 1
        %s242 = scalar_select %p241, %s240, 1
        %s243 = smul.addr %s242, 8
        %s244 = scalar_lea.vmem %s1, %s243
        %s245 = smul.u32 2, %s23
        %s246 = smul.u32 2, %s23
        %p247 = scmp.lt.s32.totalorder %s246, 1
        %s248 = scalar_select %p247, %s246, 1
        %s249 = smul.addr %s248, 8
        %s250 = scalar_lea.vmem %s2, %s249
        %s251 = smul.u32 2, %s23
        %s252 = smul.u32 2, %s23
        %s253 = smul.u32 2, %s24
        %v254 = vld [vmem:[%s244] sm:$0xff]
        %v255 = vld [vmem:[%s244 + $0x8] sm:$0xff]
        %v256 = vld [vmem:[%s238] sm:$0xff]
        %v257 = vld [vmem:[%s250] sm:$0xff]
        %v258 = vld [vmem:[%s250 + $0x8] sm:$0xff]
        %260 = vset.pattern.permute.xlu0 0
        %261 = vperm.xlu0 %260, %v257
        %v262 = vpop.permute.xlu0 %261
        %265 = vset.pattern.permute.xlu0 0
        %266 = vperm.xlu0 %265, %v258
        %v267 = vpop.permute.xlu0 %266
        %v270 = vcombine.high %v256, %v256
        %vm271 = vcmask 31744
        %v273 = vsel %vm271, %v254, 0
        %v276 = vsel %vm271, %v255, 0
        %vm278 = vcmask 1043456
        %v279 = vsel %vm278, %v256, 0
        %v281 = vsel %vm278, %v270, 0
        %283 = vmatprep.subr.mxu0 0.0
        %284 = vmatpush1.msra.mxu0 0.0
        %285 = vmatprep.subr.mxu0 0.0
        %286 = vmatpush1.msra.mxu0 0.0
        %287 = vmatprep.subr.mxu0 0.0
        %288 = vmatpush1.msra.mxu0 0.0
        %289 = vmatprep.subr.mxu0 0.0
        %290 = vmatpush1.msra.mxu0 0.0
        %291 = vmatprep.subr.mxu0 0.0
        %292 = vmatpush1.msra.mxu0 0.0
        %293 = vmatprep.subr.mxu0 0.0
        %294 = vmatpush1.msra.mxu0 0.0
        %295 = vmatprep.subr.mxu0 0.0
        %296 = vmatpush1.msra.mxu0 0.0
        %297 = vmatprep.subr.mxu0 0.0
        %298 = vmatpush1.msra.mxu0 0.0
        %299 = vmatprep.subr.mxu0 0.0
        %300 = vmatpush1.msra.mxu0 0.0
        %301 = vmatprep.subr.mxu0 0.0
        %302 = vmatpush1.msra.mxu0 0.0
        %303 = vmatprep.subr.mxu0 0.0
        %304 = vmatpush1.msra.mxu0 0.0
        %305 = vmatprep.subr.mxu0 0.0
        %306 = vmatpush1.msra.mxu0 0.0
        %307 = vmatprep.subr.mxu0 0.0
        %308 = vmatpush1.msra.mxu0 0.0
        %309 = vmatprep.subr.mxu0 0.0
        %310 = vmatpush1.msra.mxu0 0.0
        %311 = vmatprep.subr.mxu0 0.0
        %312 = vmatpush1.msra.mxu0 0.0
        %313 = vmatprep.subr.mxu0 %v281
        %314 = vmatpush1.msra.mxu0 %v279
        %315 = vmatprep.subr.mxu0 0.0
        %316 = vmatpush2.msra.mxu0 0.0
        %317 = vmatprep.subr.mxu0 0.0
        %318 = vmatpush2.msra.mxu0 0.0
        %319 = vmatprep.subr.mxu0 0.0
        %320 = vmatpush2.msra.mxu0 0.0
        %321 = vmatprep.subr.mxu0 0.0
        %322 = vmatpush2.msra.mxu0 0.0
        %323 = vmatprep.subr.mxu0 0.0
        %324 = vmatpush2.msra.mxu0 0.0
        %325 = vmatprep.subr.mxu0 0.0
        %326 = vmatpush2.msra.mxu0 0.0
        %327 = vmatprep.subr.mxu0 0.0
        %328 = vmatpush2.msra.mxu0 0.0
        %329 = vmatprep.subr.mxu0 0.0
        %330 = vmatpush2.msra.mxu0 0.0
        %331 = vmatprep.subr.mxu0 0.0
        %332 = vmatpush2.msra.mxu0 0.0
        %333 = vmatprep.subr.mxu0 0.0
        %334 = vmatpush2.msra.mxu0 0.0
        %335 = vmatprep.subr.mxu0 0.0
        %336 = vmatpush2.msra.mxu0 0.0
        %337 = vmatprep.subr.mxu0 0.0
        %338 = vmatpush2.msra.mxu0 0.0
        %339 = vmatprep.subr.mxu0 0.0
        %340 = vmatpush2.msra.mxu0 0.0
        %341 = vmatprep.subr.mxu0 0.0
        %342 = vmatpush2.msra.mxu0 0.0
        %343 = vmatprep.subr.mxu0 0.0
        %344 = vmatpush2.msra.mxu0 0.0
        %345 = vmatprep.subr.mxu0 0.0
        %346 = vmatpush2.msra.mxu0 0.0
        %347 = vmatprep.mubr.f32.mxu0 0.0
        %348 = vmatmul.mubr.f32.gmra.mxu0 %v273
        %v349 = vpop.f32.mrf.mxu0
        %v350 = vadd.f32 %v262, %v349
        %v351 = vpop.f32.mrf.mxu0
        %v352 = vadd.f32 %v262, %v351
        %353 = vmatprep.mubr.f32.mxu0 0.0
        %354 = vmatmul.mubr.f32.gmra.mxu0 %v276
        %v355 = vpop.f32.mrf.mxu0
        %v356 = vadd.f32 %v267, %v355
        %v357 = vpop.f32.mrf.mxu0
        %v358 = vadd.f32 %v267, %v357
        %359 = vdwg.mxu0
        %360 = vst [vmem:[%s229] sm:$0xff] %v350
        %361 = vst [vmem:[%s229 + $0x8] sm:$0xff] %v352
        %362 = vst [vmem:[%s229 + $0x10] sm:$0xff] %v356
        %363 = vst [vmem:[%s229 + $0x18] sm:$0xff] %v358
        %s364 = sand.u32 %s128, 1
        %s365 = scalar_lea.sflag [#allocation3], %s364
        %s366 = sand.u32 %s128, 1
        %s367 = smul.addr %s366, 32
        %s368 = scalar_lea.vmem [#allocation2], %s367
        // Predicated region
        $region33: #{tpu_custom_call.1} parent=31 // pred_check
          %p369 = pneg %p138
        $region34: #{tpu_custom_call.1} parent=31 // pred_check_branch
          %371 = sbr.rel (%p369) target = $region36
        $region35: #{tpu_custom_call.1} parent=31 // pred_region
          %s372 = smul.u32 2, %s23
          %s373 = smul.u32 2, %s24
          %s375 = ssub.s32 512, 512
          %376 = vsyncadd %s365, %s375
          %s377 = smul.addr %s372, 2
          %s378 = sadd.s32 %s373, %s377
          %s379 = smul.addr %s22, 4
          %s380 = sadd.s32 %s378, %s379
          %s381 = smul.addr %s380, 128
          %s382 = scalar_lea.hbm %s3, %s381
          %s383 = sshll.u32 %s368, 4
          %s384 = int_to_ptr.vmem [resolvable:$true] %s383
          %389 = dma.vmem_to_hbm [thread:$0]  %s384, 512, %s382, %s365, 256, 256, 16
        $region36: #{tpu_custom_call.1} parent=31 // pred_fallthru
          _
      $region32: #{tpu_custom_call.1} parent=5 // pred_fallthru
        _
      %p390 = scmp.le.s32.totalorder 2, %s12
      // Predicated region
      $region37: #{tpu_custom_call.1} parent=5 // pred_check
        %p391 = pneg %p390
      $region38: #{tpu_custom_call.1} parent=5 // pred_check_branch
        %393 = sbr.rel (%p391) target = $region40
      $region39: #{tpu_custom_call.1} parent=5 // pred_region
        %s394 = ssub.s32 %s12, 2
        // Predicated region
        $region41: #{tpu_custom_call.1} parent=39 // pred_check
          %p395 = pneg %p144
        $region42: #{tpu_custom_call.1} parent=39 // pred_check_branch
          %397 = sbr.rel (%p395) target = $region44
        $region43: #{tpu_custom_call.1} parent=39 // pred_region
          %s398 = sand.u32 %s129, 1
          %s399 = scalar_lea.sflag [#allocation3], %s398
          %s400 = sand.u32 %s129, 1
          %s401 = smul.addr %s400, 32
          %s402 = scalar_lea.vmem [#allocation2], %s401
          %403 = dma.done %s399, 512
        $region44: #{tpu_custom_call.1} parent=39 // pred_fallthru
          _
      $region40: #{tpu_custom_call.1} parent=5 // pred_fallthru
        _
    $region6: #{tpu_custom_call.1} parent=1 // loop_footer
      %s16 = sadd.s32 1, %s12
    $region7: #{tpu_custom_call.1} parent=1 // loop_footer_branch
      %11 = sbr.rel target = $region3
    $region8: #{tpu_custom_call.1} parent=1 // loop_exit
      _
    %404 = vsyncpa [#allocation3], 1
    %s405 = scalar_lea.sflag [#allocation3], 1
    %406 = vsyncpa %s405, 1

</llo_original>
